<compile_context>
chip_gen: v7x
topology: tpu7x:2x2x1
jax: 0.10.0
libtpu: 0.0.40
codegen_flags: <defaults>
</compile_context>

<pallas_src>
import jax
import jax.numpy as jnp
from jax.experimental import pallas as pl
from jax.experimental.pallas import tpu as pltpu

_LANE = 128                 # lane width: output last dim multiple of 128
_TILE_ROWS = 1024           # 1024x128 f32 tile = 512 KiB/buffer (~2 MiB live)
_WHOLE_ARRAY_VMEM_BUDGET = 8 * 1024 * 1024   # safe under v5e's 16 MiB scoped


def _identity_kernel(x_ref, o_ref):
    # The entire "forward" body of MyModel is empty; the only data movement a
    # kernelized pass-through implies is input -> output.
    o_ref[...] = x_ref[...]


def _dma_copy_kernel(x_hbm_ref, o_hbm_ref, sem):
    # Materialized copy without a VMEM round-trip: one HBM->HBM DMA.
    cp = pltpu.make_async_copy(x_hbm_ref, o_hbm_ref, sem)
    cp.start()
    cp.wait()


def _flatten_lane_dense(x):
    """Flatten to a lane-dense (rows, 128) slab, zero-padding if needed."""
    total = x.size
    rows = -(-total // _LANE)
    pad = rows * _LANE - total
    flat = x.reshape(-1)
    if pad:
        flat = jnp.pad(flat, (0, pad))
    return flat.reshape(rows, _LANE)


def _pallas_identity_impl(x):
    """Kernelized identity template (aliased, lane-dense, VMEM-guarded)."""
    orig_shape = x.shape
    total = x.size
    itemsize = jnp.dtype(x.dtype).itemsize
    cost = pl.CostEstimate(flops=0, transcendentals=0,
                           bytes_accessed=2 * total * itemsize)

    x2d = _flatten_lane_dense(x)
    rows = x2d.shape[0]

    # in + out, each double-buffered by the pipeline -> ~4x one slab.
    vmem_need = 4 * rows * _LANE * itemsize
    if vmem_need <= _WHOLE_ARRAY_VMEM_BUDGET:
        # Small input: one whole-array lane-dense VMEM block, no grid loop.
        y2d = pl.pallas_call(
            _identity_kernel,
            out_shape=jax.ShapeDtypeStruct(x2d.shape, x2d.dtype),
            in_specs=[pl.BlockSpec(memory_space=pltpu.MemorySpace.VMEM)],
            out_specs=pl.BlockSpec(memory_space=pltpu.MemorySpace.VMEM),
            input_output_aliases={0: 0},
            cost_estimate=cost,
        )(x2d)
    else:
        # Large input: 1-D grid of big row tiles (>=512 rows hits ~85% of HBM
        # roofline); "parallel" axis shards the copy over v7x's 2 TensorCores.
        tile_rows = _TILE_ROWS
        rows_padded = -(-rows // tile_rows) * tile_rows
        if rows_padded != rows:
            x2d = jnp.pad(x2d, ((0, rows_padded - rows), (0, 0)))
        y2d = pl.pallas_call(
            _identity_kernel,
            out_shape=jax.ShapeDtypeStruct((rows_padded, _LANE), x.dtype),
            grid=(rows_padded // tile_rows,),
            in_specs=[pl.BlockSpec((tile_rows, _LANE), lambda i: (i, 0))],
            out_specs=pl.BlockSpec((tile_rows, _LANE), lambda i: (i, 0)),
            input_output_aliases={0: 0},
            compiler_params=pltpu.CompilerParams(
                dimension_semantics=("parallel",)),
            cost_estimate=cost,
        )(x2d)

    y_flat = y2d.reshape(-1)
    if y_flat.shape[0] != total:
        y_flat = y_flat[:total]
    return y_flat.reshape(orig_shape)


# Donation makes the in/out alias real: no defensive copy, no fresh output
# HBM allocation.  Callers must treat the argument as consumed.
pallas_identity_donating = jax.jit(_pallas_identity_impl, donate_argnums=0)


@jax.jit
def pallas_copy_dma(x):
    """Materialized (non-aliased) copy as a single HBM->HBM DMA."""
    return pl.pallas_call(
        _dma_copy_kernel,
        out_shape=jax.ShapeDtypeStruct(x.shape, x.dtype),
        in_specs=[pl.BlockSpec(memory_space=pl.ANY)],
        out_specs=pl.BlockSpec(memory_space=pl.ANY),
        scratch_shapes=[pltpu.SemaphoreType.DMA(())],
        cost_estimate=pl.CostEstimate(
            flops=0, transcendentals=0,
            bytes_accessed=2 * x.size * jnp.dtype(x.dtype).itemsize),
    )(x)


class MyModelForward:
    """JAX-side stand-in for MyModel's forward pass.

    The PyTorch module uses no parameters in forward() and forward() returns
    None; we mirror that exactly.  `passthrough` is the zero-cost identity
    (returns its input — the production fast path); the Pallas kernels above
    are opt-in kernelized templates.
    """

    def __init__(self):
        # No learnable parameters participate in forward(); nothing to init.
        pass

    def forward(self, x):
        # Matches `def forward(self, x): return` -> returns None.
        return None

    @staticmethod
    def passthrough(x):
        # Fastest identity is no kernel: return the input as-is.
        return x


if __name__ == "__main__":
    key = jax.random.PRNGKey(0)
    x = jax.random.normal(key, (2, 4, 16, 16), dtype=jnp.float32)  # NCHW

    model = MyModelForward()

    # Exact forward semantics: returns None (no compute in the module).
    out = model.forward(x)
    assert out is None

    # Production identity: zero-copy, no kernel launch.
    y_fast = model.passthrough(x)
    assert y_fast is x

    # Aliased + donated kernel template.  Donate a separate buffer with the
    # same values so `x` stays live for the correctness check (post-call use
    # of the donated buffer would be use-after-donate).
    x_donate = x + 0.0
    y = pallas_identity_donating(x_donate)
    y = jax.block_until_ready(y)
    del x_donate  # consumed by donation; must not be touched again
    assert y.shape == x.shape and y.dtype == x.dtype
    assert bool(jnp.allclose(y, x))

    # Materialized-copy template: single HBM->HBM DMA, input not donated.
    y_dma = jax.block_until_ready(pallas_copy_dma(x))
    assert y_dma.shape == x.shape and y_dma.dtype == x.dtype
    assert bool(jnp.allclose(y_dma, x))

    print("KERNEL_OK")
</pallas_src>

<mosaic_0001>
module attributes {stable_mosaic.version = 11 : i64} {
  func.func @_identity_kernel(%arg0: memref<16x128xf32, #tpu.memory_space<vmem>>, %arg1: memref<16x128xf32, #tpu.memory_space<vmem>>) attributes {dimension_semantics = [], scalar_prefetch = 0 : i64, scratch_operands = 0 : i64, tpu.core_type = #tpu.core_type<tc>} {
    %c0 = arith.constant 0 : index
    %c0_0 = arith.constant 0 : index
    %0 = vector.load %arg0[%c0, %c0_0] : memref<16x128xf32, #tpu.memory_space<vmem>>, vector<16x128xf32>
    %c0_1 = arith.constant 0 : index
    %c0_2 = arith.constant 0 : index
    %1 = vector.load %arg1[%c0_1, %c0_2] : memref<16x128xf32, #tpu.memory_space<vmem>>, vector<16x128xf32>
    tpu.vector_store %arg1[%c0_1, %c0_2], %0 {strides = array<i32>} : memref<16x128xf32, #tpu.memory_space<vmem>>, vector<16x128xf32>,
    return
  }
}

</mosaic_0001>

<llo_original>
// kernel: _pallas_identity_impl.1
$region0: #{_pallas_identity_impl.1}
  #allocation0 [shape = 'u32[]', space=smem, size = 0x4, offset = 0x4, fixed_abs, tag = 'smem constant byte address 0x4 - core index']
  #allocation1 [shape = 'u32[144,128]{1,0:T(1,128)}', space=vmem, size = 0x12000, scoped, tag = 'internal scratch']
  %s0 = inlined_call_operand.vmem [shape: f32[16,128], index: 0, kind: input, shape index: {}, may-alias: {0,1}]
  %s1 = inlined_call_operand.vmem [shape: f32[16,128], index: 1, kind: output, shape index: {}, may-alias: {0,1}]
  %s2 = sld [smem:[#allocation0]]
  $region14: #{_pallas_identity_impl.1} parent=0
    _
  %s4 = ssub.s32 1, %s2
  %s5 = scalar_select 0, %s4, %s2
  // Predicated region
  $region2: #{_pallas_identity_impl.1} parent=0 // pred_check
    _
  $region3: #{_pallas_identity_impl.1} parent=0 // pred_check_branch
    %7 = sbr.rel (0) target = $region5
  $region4: #{_pallas_identity_impl.1} parent=0 // pred_region
    _
  $region5: #{_pallas_identity_impl.1} parent=0 // pred_fallthru
    _
  %v8 = vld [vmem:[%s0] sm:$0xff]
  %v9 = vld [vmem:[%s0 + $0x8] sm:$0xff]
  %10 = vst [vmem:[%s1] sm:$0xff] %v8
  %11 = vst [vmem:[%s1 + $0x8] sm:$0xff] %v9
  // Predicated region
  $region6: #{_pallas_identity_impl.1} parent=0 // pred_check
    _
  $region7: #{_pallas_identity_impl.1} parent=0 // pred_check_branch
    %13 = sbr.rel (0) target = $region9
  $region8: #{_pallas_identity_impl.1} parent=0 // pred_region
    _
  $region9: #{_pallas_identity_impl.1} parent=0 // pred_fallthru
    _
  // Predicated region
  $region10: #{_pallas_identity_impl.1} parent=0 // pred_check
    _
  $region11: #{_pallas_identity_impl.1} parent=0 // pred_check_branch
    %15 = sbr.rel (0) target = $region13
  $region12: #{_pallas_identity_impl.1} parent=0 // pred_region
    _
  $region13: #{_pallas_identity_impl.1} parent=0 // pred_fallthru
    _

</llo_original>
